<compile_context>
chip_gen: v5e
topology: v5e:2x2
jax: 0.10.0
libtpu: 0.0.40
codegen_flags: <defaults>
</compile_context>

<pallas_src>
import math

import jax
import jax.numpy as jnp
from jax.experimental import pallas as pl
from jax.experimental.pallas import tpu as pltpu


def _broadcast_row_kernel(vt_ref, o_ref):
    # vt_ref: (1, L) VMEM-resident row (same block every grid step), already in
    #         the output dtype.
    # o_ref : (TB, L) output tile for this grid step.
    # Store-bound body: broadcast the row down the sublanes and store.
    o_ref[...] = jnp.broadcast_to(vt_ref[...], o_ref.shape)


# Minimum sublane multiple per output itemsize (f32 -> 8, bf16 -> 16, i8 -> 32).
_SUBLANE_FOR_ITEMSIZE = {8: 8, 4: 8, 2: 16, 1: 32}


def view_token_forward(
    x,
    view_token,
    *,
    tile_bytes=4 << 20,        # per-output-tile budget; x2 for double buffering
    min_pallas_rows=1024,      # below this, plain XLA broadcast wins
    min_split_bytes=2 << 20,   # output size above which we force a >=2-step grid
    max_packed_cols=2048,      # cap on the lane-packed row width
    force_pallas=False,
):
    """Pallas implementation of ViewTokenNetwork.forward.

    x:          any array whose leading dim is the batch (only len(x)/dtype used).
    view_token: [1, dim] parameter.
    returns:    [len(x), dim] = view_token broadcast over the batch,
                dtype = result_type(x.dtype, view_token.dtype).
    """
    n = int(x.shape[0])
    dim = int(view_token.shape[-1])
    out_dtype = jnp.result_type(x.dtype, view_token.dtype)
    vt = view_token.reshape(1, dim).astype(out_dtype)

    # Small batch: fixed pallas_call / custom-call boundary cost dwarfs the few
    # HBM rows written; XLA's fused broadcast is already at roofline.
    if n < min_pallas_rows and not force_pallas:
        return jnp.broadcast_to(vt, (n, dim))

    itemsize = jnp.dtype(out_dtype).itemsize
    sublane = _SUBLANE_FOR_ITEMSIZE.get(itemsize, 8)

    # ---- Lane-dense packing ------------------------------------------------
    # If dim is not a multiple of 128, pack rpp = lcm(dim,128)/dim logical rows
    # into one output row whose width IS a multiple of 128 -> every store is a
    # full-width vst and every DMA row is fat.  n % rpp != 0 is handled by
    # padding up to one extra packed row (the kernel writes the same broadcast
    # pattern there) and trimming after the zero-cost reshape.
    rpp, out_cols = 1, dim
    if dim % 128 != 0:
        lcm = dim * 128 // math.gcd(dim, 128)
        if lcm <= max_packed_cols:
            rpp, out_cols = lcm // dim, lcm
        # else: fall back to out_cols=dim (masked stores); rare odd dims only.

    if rpp > 1:
        out_rows = -(-n // rpp)                    # ceil(n / rpp)
        pad_rows = out_rows * rpp - n
        vt_in = jnp.tile(vt, (1, rpp))             # (1, out_cols), out_dtype
    else:
        out_rows, pad_rows = n, 0
        vt_in = vt

    # ---- Tile size / grid --------------------------------------------------
    row_bytes = out_cols * itemsize
    total_bytes = out_rows * row_bytes

    # Biggest sublane-aligned tile inside the byte budget (double-buffered
    # footprint = 2 * tile_bytes, safe on v5e's 16 MiB scoped default).
    tb = max(sublane, (tile_bytes // row_bytes) // sublane * sublane)

    if out_rows <= tb:
        if total_bytes >= min_split_bytes and out_rows >= 2 * sublane:
            # Large single-tile case: split into 2 steps so v7x's two
            # TensorCores each get a tile (dimension_semantics="parallel").
            half = -(-out_rows // 2)
            tb = -(-half // sublane) * sublane
        else:
            tb = out_rows                          # full-extent block is valid

    grid = (pl.cdiv(out_rows, tb),)

    out = pl.pallas_call(
        _broadcast_row_kernel,
        out_shape=jax.ShapeDtypeStruct((out_rows, out_cols), out_dtype),
        grid=grid,
        in_specs=[pl.BlockSpec((1, out_cols), lambda i: (0, 0))],  # resident row
        out_specs=pl.BlockSpec((tb, out_cols), lambda i: (i, 0)),
        compiler_params=pltpu.CompilerParams(
            dimension_semantics=("parallel",),     # megacore-shard the tiles
        ),
        cost_estimate=pl.CostEstimate(
            flops=0,
            transcendentals=0,
            bytes_accessed=int(total_bytes + row_bytes),
        ),
    )(vt_in)

    if rpp > 1:
        out = out.reshape(out_rows * rpp, dim)     # pure layout plumbing
        if pad_rows:
            out = out[:n]
    return out


# ----------------------------- verification ---------------------------------

def _reference(x, view_token):
    return jnp.ones((x.shape[0], 1), dtype=x.dtype) * view_token


def _check(out, x, view_token, tag):
    ref = _reference(x, view_token)
    assert out.shape == ref.shape, (tag, out.shape, ref.shape)
    assert out.dtype == ref.dtype, (tag, out.dtype, ref.dtype)
    assert jnp.allclose(out, ref), f"{tag}: mismatch vs reference broadcast"


if __name__ == "__main__":
    key = jax.random.PRNGKey(0)
    k_x, k_vt, k_x2, k_vt2, k_vt3 = jax.random.split(key, 5)

    # --- Module-shaped example (NCHW input, dim=32) ---------------------------
    B, C, H, W = 2, 4, 16, 16
    dim = 32
    x = jax.random.normal(k_x, (B, C, H, W), dtype=jnp.float32)
    view_token = jax.random.normal(k_vt, (1, dim), dtype=jnp.float32)

    # 1) Tiny batch: fast path (XLA broadcast, no kernel launch).
    out_small = jax.block_until_ready(view_token_forward(x, view_token))
    _check(out_small, x, view_token, "tiny-batch fast path")

    # 2) Same tiny batch through the Pallas kernel (packed + padded, 1 step).
    out_small_k = jax.block_until_ready(
        view_token_forward(x, view_token, force_pallas=True))
    _check(out_small_k, x, view_token, "tiny-batch pallas path")

    # 3) Large batch, dim=32: lane-dense packed path, grid auto-splits >=2 steps.
    x_big = jax.random.normal(k_x2, (65536,), dtype=jnp.float32)
    out_big = jax.block_until_ready(view_token_forward(x_big, view_token))
    _check(out_big, x_big, view_token, "packed multi-tile path")

    # 4) n % rpp != 0 and 128 % dim != 0 (dim=48 -> lcm packing + tail trim).
    dim48 = 48
    vt48 = jax.random.normal(k_vt2, (1, dim48), dtype=jnp.float32)
    x_odd = jax.random.normal(k_x2, (999,), dtype=jnp.float32)
    out_odd = jax.block_until_ready(
        view_token_forward(x_odd, vt48, force_pallas=True))
    _check(out_odd, x_odd, vt48, "lcm-packed padded path")

    # 5) Wide dim (multiple of 128): plain lane-dense layout, megacore split.
    dim_wide = 256
    vt_wide = jax.random.normal(k_vt2, (1, dim_wide), dtype=jnp.float32)
    x_wide = jax.random.normal(k_x2, (2048, 3), dtype=jnp.float32)
    out_wide = jax.block_until_ready(view_token_forward(x_wide, vt_wide))
    _check(out_wide, x_wide, vt_wide, "plain tiled path")

    # 6) bf16 output (dtype-aware sublane alignment path).
    vt_bf16 = jax.random.normal(k_vt3, (1, dim), dtype=jnp.bfloat16)
    x_bf16 = jax.random.normal(k_x2, (5000,), dtype=jnp.bfloat16)
    out_bf16 = jax.block_until_ready(view_token_forward(x_bf16, vt_bf16))
    _check(out_bf16, x_bf16, vt_bf16, "bf16 packed path")

    print("KERNEL_OK")
</pallas_src>

<mosaic_0001>
module attributes {stable_mosaic.version = 11 : i64} {
  func.func @_broadcast_row_kernel(%arg0: i32, %arg1: memref<1x128xf32, #tpu.memory_space<vmem>>, %arg2: memref<1x128xf32, #tpu.memory_space<vmem>>) attributes {dimension_semantics = [#tpu.dimension_semantics<parallel>], iteration_bounds = array<i64: 1>, scalar_prefetch = 0 : i64, scratch_operands = 0 : i64, tpu.core_type = #tpu.core_type<tc>, window_params = [{pipeline_mode = #tpu.pipeline_mode<synchronous>, transform_indices = @transform_0, window_bounds = array<i64: 1, 128>}, {transform_indices = @transform_1, window_bounds = array<i64: 1, 128>}]} {
    %c0 = arith.constant 0 : index
    %c0_0 = arith.constant 0 : index
    %0 = vector.load %arg1[%c0, %c0_0] : memref<1x128xf32, #tpu.memory_space<vmem>>, vector<1x128xf32>
    %c0_1 = arith.constant 0 : index
    %c0_2 = arith.constant 0 : index
    %1 = vector.load %arg2[%c0_1, %c0_2] : memref<1x128xf32, #tpu.memory_space<vmem>>, vector<1x128xf32>
    tpu.vector_store %arg2[%c0_1, %c0_2], %0 {strides = array<i32>} : memref<1x128xf32, #tpu.memory_space<vmem>>, vector<1x128xf32>,
    return
  }
  func.func @transform_0(%arg0: i32) -> (i32, i32) {
    %c0_i32 = arith.constant 0 : i32
    %c0_i32_0 = arith.constant 0 : i32
    %c0_i32_1 = arith.constant 0 : i32
    return %c0_i32, %c0_i32_0 : i32, i32
  }
  func.func @transform_1(%arg0: i32) -> (i32, i32) {
    %c0_i32 = arith.constant 0 : i32
    %c0_i32_0 = arith.constant 0 : i32
    return %arg0, %c0_i32 : i32, i32
  }
}

</mosaic_0001>

<llo_original>
// kernel: tpu_custom_call.1
$region0: #{tpu_custom_call.1}
  #allocation0 [shape = 'u32[]', space=smem, size = 0x4, offset = 0x4, fixed_abs, tag = 'smem constant byte address 0x4 - core index']
  #allocation1 [shape = 'u32[72,128]{1,0:T(1,128)}', space=vmem, size = 0x9000, scoped, tag = 'internal scratch']
  %s0 = inlined_call_operand.hbm [shape: f32[1,128], index: 0, kind: input, shape index: {}]
  %s1 = inlined_call_operand.hbm [shape: f32[1,128], index: 1, kind: output, shape index: {}]
  %s2 = sld [smem:[#allocation0]]
  $region18: #{tpu_custom_call.1} parent=0
    _
  %s4 = ssub.s32 1, %s2
  %s5 = scalar_select 0, %s4, %s2
  $region1: #{tpu_custom_call.1} parent=0
    #allocation2 [shape = 'u8[512]{0}', space=vmem, size = 0x400, scoped, tag = 'input window, operand 0, single buffered']
    #allocation3 [shape = 's32[1]{0}', space=sflag, size = 0x4, scoped, tag = 'scoped memory for tpu_custom_call.1']
    #allocation4 [shape = 's32[1]{0}', space=sflag, size = 0x4, scoped, tag = 'scoped memory for tpu_custom_call.1']
    #allocation5 [shape = 'u8[512]{0}', space=vmem, size = 0x400, scoped, tag = 'output window, operand 0, single buffered']
    %6 = vsyncpa [#allocation3], 0
    %7 = vsyncpa [#allocation4], 0
    // Predicated region
    $region2: #{tpu_custom_call.1} parent=1 // pred_check
      _
    $region3: #{tpu_custom_call.1} parent=1 // pred_check_branch
      %9 = sbr.rel (0) target = $region5
    $region4: #{tpu_custom_call.1} parent=1 // pred_region
      %11 = vsyncadd [#allocation3], 0
      %s13 = sshll.u32 %s0, 4
      %s14 = int_to_ptr.hbm [resolvable:$true] %s13
      %s15 = sshll.u32 [#allocation2], 4
      %s16 = int_to_ptr.vmem [resolvable:$true] %s15
      %18 = dma.hbm_to_vmem [thread:$0]  %s14, 16, %s16, [#allocation3]
    $region5: #{tpu_custom_call.1} parent=1 // pred_fallthru
      _
    // Predicated region
    $region6: #{tpu_custom_call.1} parent=1 // pred_check
      _
    $region7: #{tpu_custom_call.1} parent=1 // pred_check_branch
      %20 = sbr.rel (0) target = $region9
    $region8: #{tpu_custom_call.1} parent=1 // pred_region
      %22 = dma.done [#allocation3], 16
    $region9: #{tpu_custom_call.1} parent=1 // pred_fallthru
      _
    %v23 = vld [vmem:[#allocation2] sm:$0x1]
    %24 = vst [vmem:[#allocation5] sm:$0x1] %v23
    // Predicated region
    $region10: #{tpu_custom_call.1} parent=1 // pred_check
      _
    $region11: #{tpu_custom_call.1} parent=1 // pred_check_branch
      %26 = sbr.rel (0) target = $region13
    $region12: #{tpu_custom_call.1} parent=1 // pred_region
      %28 = vsyncadd [#allocation4], 0
      %s30 = sshll.u32 [#allocation5], 4
      %s31 = int_to_ptr.vmem [resolvable:$true] %s30
      %s32 = sshll.u32 %s1, 4
      %s33 = int_to_ptr.hbm [resolvable:$true] %s32
      %35 = dma.vmem_to_hbm [thread:$0]  %s31, 16, %s33, [#allocation4]
    $region13: #{tpu_custom_call.1} parent=1 // pred_fallthru
      _
    // Predicated region
    $region14: #{tpu_custom_call.1} parent=1 // pred_check
      _
    $region15: #{tpu_custom_call.1} parent=1 // pred_check_branch
      %37 = sbr.rel (0) target = $region17
    $region16: #{tpu_custom_call.1} parent=1 // pred_region
      %39 = dma.done [#allocation4], 16
    $region17: #{tpu_custom_call.1} parent=1 // pred_fallthru
      _
    %40 = vsyncpa [#allocation3], 1
    %41 = vsyncpa [#allocation4], 1

</llo_original>
